<compile_context>
chip_gen: v5e
topology: v5e:2x2
jax: 0.10.0
libtpu: 0.0.40
codegen_flags: <defaults>
</compile_context>

<pallas_src>
import functools
import math

import jax
import jax.numpy as jnp
from jax import lax
from jax.experimental import pallas as pl
from jax.experimental.pallas import tpu as pltpu


# ----------------------------------------------------------------------------
# small helpers
# ----------------------------------------------------------------------------
def _round_up(x, m):
    return (x + m - 1) // m * m


def _nbytes(shape, dtype):
    return math.prod(shape) * jnp.dtype(dtype).itemsize


def _vmem_cap():
    # Generation-aware VMEM budget: ~3/4 of physical capacity (≈48 MiB on v7x,
    # ≈96 MiB on v5e/v6e) leaves headroom for compiler scratch + double buffering.
    try:
        cap = int(pltpu.get_tpu_info().vmem_capacity_bytes)
    except Exception:
        cap = 128 << 20
    return max(16 << 20, (cap * 3) // 4)


def _vmem_limit(*nbytes):
    need = 2 * sum(nbytes) + (4 << 20)
    return int(max(16 << 20, min(need, _vmem_cap())))


def _row_tile(n):
    """Largest row tile <= 512 that divides n (rows are pre-padded to multiples of 8)."""
    if n % 8:
        return n
    t = min(n, 512)
    while n % t:
        t //= 2
    return t


def _dst_tile(nd_pad):
    """Dst-node tile: multiple of 8 dividing nd_pad, <=128, >=2 tiles when possible."""
    t = min(nd_pad, 128)
    if t == nd_pad and nd_pad > 8:
        t = nd_pad // 2          # give megacore (v7x) at least 2 parallel grid steps
    t = max(8, (t // 8) * 8)
    while nd_pad % t:
        t -= 8
    return t


def _block_diag(blocks):
    """[n_heads, d_k, d_k] -> [H, H] block-diagonal (parameter-only host glue)."""
    nh, dk, _ = blocks.shape
    out = jnp.zeros((nh * dk, nh * dk), jnp.float32)
    for i in range(nh):
        out = out.at[i * dk:(i + 1) * dk, i * dk:(i + 1) * dk].set(blocks[i])
    return out


# ----------------------------------------------------------------------------
# Kernel 1: fused linear (+ optional GELU), row-tiled 'parallel' grid, bf16 MXU operands
# ----------------------------------------------------------------------------
def _linear_kernel(x_ref, w_ref, b_ref, o_ref, *, act):
    y = jnp.dot(x_ref[...].astype(jnp.bfloat16), w_ref[...],
                preferred_element_type=jnp.float32) + b_ref[...]
    if act == "gelu":
        # tanh-approximate GELU (PyTorch F.gelu uses the exact erf form).
        c = 0.7978845608028654  # sqrt(2/pi)
        y = 0.5 * y * (1.0 + jnp.tanh(c * (y + 0.044715 * y * y * y)))
    o_ref[...] = y.astype(o_ref.dtype)


def linear(x, w, b, act="none", out_dtype=jnp.float32):
    """y = act(x @ w + b); w is expected in bf16, accumulation in f32."""
    n, k = x.shape
    m = w.shape[1]
    t = _row_tile(n)
    vmem = _vmem_limit(
        _nbytes((t, k), x.dtype), _nbytes((k, m), w.dtype),
        _nbytes((1, m), jnp.float32), _nbytes((t, m), out_dtype))
    return pl.pallas_call(
        functools.partial(_linear_kernel, act=act),
        out_shape=jax.ShapeDtypeStruct((n, m), out_dtype),
        grid=(n // t,),
        in_specs=[
            pl.BlockSpec((t, k), lambda i: (i, 0)),
            pl.BlockSpec((k, m), lambda i: (0, 0)),
            pl.BlockSpec((1, m), lambda i: (0, 0)),
        ],
        out_specs=pl.BlockSpec((t, m), lambda i: (i, 0)),
        compiler_params=pltpu.CompilerParams(
            dimension_semantics=("parallel",), vmem_limit_bytes=vmem),
    )(x, w, b.reshape(1, m).astype(jnp.float32))


# ----------------------------------------------------------------------------
# Kernel 2: index-based per-edge-type HGT message passing
#   - edges pre-sorted by dst; each grid step owns one dst-node tile and its contiguous
#     edge range (scalar-prefetched offsets / indices in SMEM)
#   - gather of K|V rows (pri/sqrt(d_k) and relation matrices folded into the weights)
#     via dynamic pl.ds row loads; q comes in as the dst tile's BlockSpec block
#   - exact per-destination edge-softmax via an online (flash-style) m/l accumulator
#     held in [TD, H] VMEM scratch; f32 accumulation and exact final division
# ----------------------------------------------------------------------------
def _hgt_edge_kernel(lo_ref, src_ref, dloc_ref, kv_ref, q_ref, hb_ref, o_ref,
                     m_sc, l_sc, acc_sc):
    H = q_ref.shape[-1]
    t = pl.program_id(0)
    lo = lo_ref[t]
    hi = lo_ref[t + 1]

    # per-destination online-softmax state (head values broadcast across d_k lanes)
    m_sc[...] = jnp.full_like(m_sc, -1e30)
    l_sc[...] = jnp.zeros_like(l_sc)
    acc_sc[...] = jnp.zeros_like(acc_sc)

    hb = hb_ref[...]  # [H, H] block-diag-of-ones: per-head reduce + broadcast in one matmul

    def body(e, carry):
        s = src_ref[e]                       # global src row (SMEM scalar)
        d = dloc_ref[e]                      # dst row local to this tile (SMEM scalar)
        row = kv_ref[pl.ds(s, 1), :]         # [1, 2H]  (k | v) gather
        k_row = row[:, :H]
        v_row = row[:, H:]
        q_row = q_ref[pl.ds(d, 1), :]        # [1, H]
        # per-head <q, k> (pri/sqrt(d_k) folded into k), broadcast across each head's lanes
        s_b = jnp.dot(q_row * k_row, hb, preferred_element_type=jnp.float32)   # [1, H]
        m_old = m_sc[pl.ds(d, 1), :]
        m_new = jnp.maximum(m_old, s_b)
        alpha = jnp.exp(m_old - m_new)
        p = jnp.exp(s_b - m_new)
        m_sc[pl.ds(d, 1), :] = m_new
        l_sc[pl.ds(d, 1), :] = alpha * l_sc[pl.ds(d, 1), :] + p
        acc_sc[pl.ds(d, 1), :] = alpha * acc_sc[pl.ds(d, 1), :] + p * v_row
        return carry

    lax.fori_loop(lo, hi, body, 0)

    l = l_sc[...]
    has = l > 0.0                             # dst rows with no in-edges of this etype -> 0
    o_ref[...] = jnp.where(has, acc_sc[...] / jnp.where(has, l, 1.0), 0.0)


def hgt_edge_aggregate(kv, q, hb, lo, src_s, dloc_s, *, td):
    ns_pad, two_h = kv.shape
    nd_pad, H = q.shape
    num_tiles = nd_pad // td
    vmem = _vmem_limit(
        _nbytes((ns_pad, two_h), jnp.float32),
        _nbytes((td, H), jnp.float32),
        _nbytes((H, H), jnp.float32),
        _nbytes((td, H), jnp.float32),
        3 * _nbytes((td, H), jnp.float32))
    grid_spec = pltpu.PrefetchScalarGridSpec(
        num_scalar_prefetch=3,
        grid=(num_tiles,),
        in_specs=[
            pl.BlockSpec((ns_pad, two_h), lambda t, _lo, _si, _dl: (0, 0)),  # kv resident
            pl.BlockSpec((td, H), lambda t, _lo, _si, _dl: (t, 0)),          # q tile (dst block)
            pl.BlockSpec((H, H), lambda t, _lo, _si, _dl: (0, 0)),           # head reduce matrix
        ],
        out_specs=pl.BlockSpec((td, H), lambda t, _lo, _si, _dl: (t, 0)),
        scratch_shapes=[pltpu.VMEM((td, H), jnp.float32)] * 3,               # m, l, acc
    )
    return pl.pallas_call(
        _hgt_edge_kernel,
        out_shape=jax.ShapeDtypeStruct((nd_pad, H), jnp.float32),
        grid_spec=grid_spec,
        compiler_params=pltpu.CompilerParams(
            dimension_semantics=("parallel",), vmem_limit_bytes=vmem),
    )(lo, src_s, dloc_s, kv, q, hb)


# ----------------------------------------------------------------------------
# Kernel 3: fused node update (mean over edge types + a-linear + skip gate + LayerNorm);
#           the per-edge-type aggregates arrive as separate inputs (no stacking).
# ----------------------------------------------------------------------------
def _node_update_kernel(*refs, n_rel):
    t_refs = refs[:n_rel]
    h_ref, wa_ref, ba_ref, alpha_ref, g_ref, b_ref, o_ref = refs[n_rel:]
    t_sum = t_refs[0][...]
    for r in range(1, n_rel):
        t_sum = t_sum + t_refs[r][...]
    t_mean = t_sum * (1.0 / n_rel)                      # cross_reducer='mean'
    trans = jnp.dot(t_mean.astype(jnp.bfloat16), wa_ref[...],
                    preferred_element_type=jnp.float32) + ba_ref[...]
    alpha = alpha_ref[...]                              # (1,1) sigmoid(skip)
    out = alpha * trans + (1.0 - alpha) * h_ref[...]
    mu = jnp.mean(out, axis=-1, keepdims=True)          # LayerNorm (eps=1e-5)
    d = out - mu
    var = jnp.mean(d * d, axis=-1, keepdims=True)
    o_ref[...] = d * lax.rsqrt(var + 1e-5) * g_ref[...] + b_ref[...]


def node_update(t_list, h_prev, wa, ba, alpha, gamma, beta):
    n_rel = len(t_list)
    n, H = h_prev.shape
    t = _row_tile(n)
    vmem = _vmem_limit(
        (n_rel + 2) * _nbytes((t, H), jnp.float32),
        _nbytes((H, H), jnp.bfloat16), 4 * _nbytes((1, H), jnp.float32))
    in_specs = ([pl.BlockSpec((t, H), lambda i: (i, 0)) for _ in range(n_rel)]
                + [pl.BlockSpec((t, H), lambda i: (i, 0)),
                   pl.BlockSpec((H, H), lambda i: (0, 0)),
                   pl.BlockSpec((1, H), lambda i: (0, 0)),
                   pl.BlockSpec((1, 1), lambda i: (0, 0)),
                   pl.BlockSpec((1, H), lambda i: (0, 0)),
                   pl.BlockSpec((1, H), lambda i: (0, 0))])
    return pl.pallas_call(
        functools.partial(_node_update_kernel, n_rel=n_rel),
        out_shape=jax.ShapeDtypeStruct((n, H), jnp.float32),
        grid=(n // t,),
        in_specs=in_specs,
        out_specs=pl.BlockSpec((t, H), lambda i: (i, 0)),
        compiler_params=pltpu.CompilerParams(
            dimension_semantics=("parallel",), vmem_limit_bytes=vmem),
    )(*t_list, h_prev, wa, ba.reshape(1, H), alpha.reshape(1, 1),
      gamma.reshape(1, H), beta.reshape(1, H))


# ----------------------------------------------------------------------------
# Parameter init (deterministic, synthetic; mirrors DGL HGT parameter shapes)
# ----------------------------------------------------------------------------
def init_params(key, node_types, edge_types, n_inp, n_hid, n_out, n_layers, n_heads):
    assert n_hid % n_heads == 0
    d_k = n_hid // n_heads
    keys = iter(jax.random.split(key, 256))

    def dense(din, dout):
        return jax.random.normal(next(keys), (din, dout), jnp.float32) / math.sqrt(din)

    params = {
        "adapt": {nt: (dense(n_inp[nt], n_hid), jnp.zeros((n_hid,), jnp.float32))
                  for nt in node_types},
        "layers": [],
        "out_w": dense(n_hid, n_out),
        "out_b": jnp.zeros((n_out,), jnp.float32),
    }
    for _ in range(n_layers):
        lp = {"k": {}, "q": {}, "v": {}, "a": {}, "norm": {}, "skip": {},
              "rel_att": {}, "rel_msg": {}, "rel_pri": {}}
        for nt in node_types:
            for name in ("k", "q", "v", "a"):
                lp[name][nt] = (dense(n_hid, n_hid), jnp.zeros((n_hid,), jnp.float32))
            lp["norm"][nt] = (jnp.ones((n_hid,), jnp.float32), jnp.zeros((n_hid,), jnp.float32))
            lp["skip"][nt] = jnp.ones((), jnp.float32)
        for _src, ename, _dst in edge_types:
            lp["rel_att"][ename] = (jax.random.normal(next(keys), (n_heads, d_k, d_k),
                                                      jnp.float32) / math.sqrt(d_k))
            lp["rel_msg"][ename] = (jax.random.normal(next(keys), (n_heads, d_k, d_k),
                                                      jnp.float32) / math.sqrt(d_k))
            lp["rel_pri"][ename] = jnp.ones((n_heads,), jnp.float32)
        params["layers"].append(lp)
    return params


# ----------------------------------------------------------------------------
# Forward pass (glue in plain JAX, hot paths in the fused Pallas kernels above)
# ----------------------------------------------------------------------------
def hgt_forward(params, feats, edge_index, node_types, edge_types, *,
                out_key, n_layers, n_heads):
    bf16, f32 = jnp.bfloat16, jnp.float32
    n_hid = params["out_w"].shape[0]
    d_k = n_hid // n_heads
    inv_sqrt_dk = 1.0 / math.sqrt(d_k)

    # Pad node counts once to sublane multiples; padded rows carry inert (finite) junk
    # that never mixes into real rows (the indexed gather never references them).
    n_real = {nt: feats[nt].shape[0] for nt in node_types}
    n_pad = {nt: _round_up(n_real[nt], 8) for nt in node_types}

    # adapt_ws + GELU   (dropout is identity in eval mode)
    h = {}
    for nt in node_types:
        x = jnp.pad(feats[nt], ((0, n_pad[nt] - n_real[nt]), (0, 0)))
        w, b = params["adapt"][nt]
        h[nt] = linear(x, w.astype(bf16), b, act="gelu")

    # Per-edge-type index metadata: edges sorted by destination, per-dst-tile edge-range
    # offsets + src / dst-local indices (scalar-prefetched into SMEM by the edge kernel).
    edge_meta = {}
    for et in edge_types:
        _src, _, dst = et
        s_idx, d_idx = edge_index[et]
        td = _dst_tile(n_pad[dst])
        num_tiles = n_pad[dst] // td
        order = jnp.argsort(d_idx)
        src_s = s_idx[order].astype(jnp.int32)
        dst_s = d_idx[order].astype(jnp.int32)
        dloc_s = (dst_s % td).astype(jnp.int32)
        bounds = jnp.arange(num_tiles + 1, dtype=jnp.int32) * td
        lo = jnp.searchsorted(dst_s, bounds, side="left").astype(jnp.int32)
        edge_meta[et] = (td, lo, src_s, dloc_s)

    # [H, H] block-diagonal-of-ones: per-head reduce + broadcast, shared by all edge types.
    head_id = jnp.arange(n_hid, dtype=jnp.int32) // d_k
    hb = (head_id[:, None] == head_id[None, :]).astype(f32)

    for layer in range(n_layers):
        lp = params["layers"][layer]

        # Q once per (dst) node type, shared across all edge types targeting it.
        q = {}
        for nt in node_types:
            wq, bq = lp["q"][nt]
            q[nt] = linear(h[nt], wq.astype(bf16), bq)

        agg = {nt: [] for nt in node_types}
        for et in edge_types:
            src, ename, dst = et
            wk, bk = lp["k"][src]
            wv, bv = lp["v"][src]
            # Fold relation_att / relation_msg and rel_pri/sqrt(d_k) into the K|V weights
            # (parameter-only host glue, 2H=256-wide MXU-friendly projection).
            att_bd = _block_diag(lp["rel_att"][ename])
            msg_bd = _block_diag(lp["rel_msg"][ename])
            pri_cols = jnp.repeat(lp["rel_pri"][ename] * inv_sqrt_dk, d_k)   # [H]
            wk_f = (wk @ att_bd) * pri_cols[None, :]
            bk_f = (bk @ att_bd) * pri_cols
            wv_f = wv @ msg_bd
            bv_f = bv @ msg_bd
            wkv = jnp.concatenate([wk_f, wv_f], axis=1).astype(bf16)
            bkv = jnp.concatenate([bk_f, bv_f])
            kv = linear(h[src], wkv, bkv)                     # [Ns_pad, 2H] f32
            td, lo, src_s, dloc_s = edge_meta[et]
            t_et = hgt_edge_aggregate(kv, q[dst], hb, lo, src_s, dloc_s, td=td)
            agg[dst].append(t_et)

        new_h = {}
        for nt in node_types:
            assert agg[nt], f"node type {nt!r} receives no edge type"
            wa, ba = lp["a"][nt]
            gamma, beta = lp["norm"][nt]
            alpha = jax.nn.sigmoid(lp["skip"][nt])
            new_h[nt] = node_update(agg[nt], h[nt], wa.astype(bf16), ba,
                                    alpha, gamma, beta)
        h = new_h

    # Final projection: pad the output width to 128 lanes (lane-dense stores), slice outside.
    n_out = params["out_w"].shape[1]
    m_pad = _round_up(n_out, 128)
    w_out = jnp.zeros((n_hid, m_pad), f32).at[:, :n_out].set(params["out_w"]).astype(bf16)
    b_out = jnp.zeros((m_pad,), f32).at[:n_out].set(params["out_b"])
    out = linear(h[out_key], w_out, b_out, act="none")
    return out[: n_real[out_key], :n_out]


# ----------------------------------------------------------------------------
if __name__ == "__main__":
    key = jax.random.PRNGKey(0)

    node_types = ["paper", "author"]
    edge_types = [("paper", "written_by", "author"),
                  ("author", "writes", "paper"),
                  ("paper", "cites", "paper")]
    n_inp = {"paper": 13, "author": 7}
    n_hid, n_out = 128, 8            # n_hid multiple of 128 -> lane-dense stores
    n_layers, n_heads = 2, 4
    num_nodes = {"paper": 24, "author": 16}
    num_edges = 40

    kf = jax.random.split(key, 8)
    feats = {
        "paper": jax.random.normal(kf[0], (num_nodes["paper"], n_inp["paper"]), jnp.float32),
        "author": jax.random.normal(kf[1], (num_nodes["author"], n_inp["author"]), jnp.float32),
    }
    edge_index = {}
    for i, et in enumerate(edge_types):
        src, _, dst = et
        k1, k2 = jax.random.split(kf[2 + i])
        edge_index[et] = (
            jax.random.randint(k1, (num_edges,), 0, num_nodes[src]),
            jax.random.randint(k2, (num_edges,), 0, num_nodes[dst]),
        )

    params = init_params(kf[7], node_types, edge_types, n_inp, n_hid, n_out,
                         n_layers, n_heads)

    out = hgt_forward(params, feats, edge_index, node_types, edge_types,
                      out_key="paper", n_layers=n_layers, n_heads=n_heads)
    out = jax.block_until_ready(out)
    assert out.shape == (num_nodes["paper"], n_out), out.shape
    assert bool(jnp.all(jnp.isfinite(out)))
    print("KERNEL_OK")
</pallas_src>

<mosaic_0001>
module attributes {stable_mosaic.version = 11 : i64} {
  func.func @_linear_kernel(%arg0: i32, %arg1: memref<24x13xf32, #tpu.memory_space<vmem>>, %arg2: memref<13x128xbf16, #tpu.memory_space<vmem>>, %arg3: memref<1x128xf32, #tpu.memory_space<vmem>>, %arg4: memref<24x128xf32, #tpu.memory_space<vmem>>) attributes {dimension_semantics = [#tpu.dimension_semantics<parallel>], iteration_bounds = array<i64: 1>, scalar_prefetch = 0 : i64, scratch_operands = 0 : i64, tpu.core_type = #tpu.core_type<tc>, window_params = [{transform_indices = @transform_0, window_bounds = array<i64: 24, 13>}, {pipeline_mode = #tpu.pipeline_mode<synchronous>, transform_indices = @transform_1, window_bounds = array<i64: 13, 128>}, {pipeline_mode = #tpu.pipeline_mode<synchronous>, transform_indices = @transform_2, window_bounds = array<i64: 1, 128>}, {transform_indices = @transform_3, window_bounds = array<i64: 24, 128>}]} {
    %c0 = arith.constant 0 : index
    %c0_0 = arith.constant 0 : index
    %0 = vector.load %arg1[%c0, %c0_0] : memref<24x13xf32, #tpu.memory_space<vmem>>, vector<24x13xf32>
    %1 = arith.truncf %0 : vector<24x13xf32> to vector<24x13xbf16>
    %c0_1 = arith.constant 0 : index
    %c0_2 = arith.constant 0 : index
    %2 = vector.load %arg2[%c0_1, %c0_2] : memref<13x128xbf16, #tpu.memory_space<vmem>>, vector<13x128xbf16>
    %cst = arith.constant dense<0.000000e+00> : vector<24x128xf32>
    %3 = tpu.matmul %1, %2, %cst {dimension_numbers = #tpu.dot_dimension_numbers<[1], [0], [0], [1], [0, 0, 1, 1], [], []>} : vector<24x13xbf16>, vector<13x128xbf16>, vector<24x128xf32> -> vector<24x128xf32>
    %c0_3 = arith.constant 0 : index
    %c0_4 = arith.constant 0 : index
    %4 = vector.load %arg3[%c0_3, %c0_4] : memref<1x128xf32, #tpu.memory_space<vmem>>, vector<1x128xf32>
    %5 = vector.broadcast %4 : vector<1x128xf32> to vector<24x128xf32>
    %6 = arith.addf %3, %5 : vector<24x128xf32>
    %cst_5 = arith.constant 5.000000e-01 : f32
    %7 = vector.broadcast %cst_5 : f32 to vector<24x128xf32>
    %8 = arith.mulf %7, %6 : vector<24x128xf32>
    %cst_6 = arith.constant 4.471500e-02 : f32
    %9 = vector.broadcast %cst_6 : f32 to vector<24x128xf32>
    %10 = arith.mulf %9, %6 : vector<24x128xf32>
    %11 = arith.mulf %10, %6 : vector<24x128xf32>
    %12 = arith.mulf %11, %6 : vector<24x128xf32>
    %13 = arith.addf %6, %12 : vector<24x128xf32>
    %cst_7 = arith.constant 0.797884583 : f32
    %14 = vector.broadcast %cst_7 : f32 to vector<24x128xf32>
    %15 = arith.mulf %14, %13 : vector<24x128xf32>
    %16 = math.tanh %15 : vector<24x128xf32>
    %cst_8 = arith.constant 1.000000e+00 : f32
    %17 = vector.broadcast %cst_8 : f32 to vector<24x128xf32>
    %18 = arith.addf %17, %16 : vector<24x128xf32>
    %19 = arith.mulf %8, %18 : vector<24x128xf32>
    %c0_9 = arith.constant 0 : index
    %c0_10 = arith.constant 0 : index
    %20 = vector.load %arg4[%c0_9, %c0_10] : memref<24x128xf32, #tpu.memory_space<vmem>>, vector<24x128xf32>
    tpu.vector_store %arg4[%c0_9, %c0_10], %19 {strides = array<i32>} : memref<24x128xf32, #tpu.memory_space<vmem>>, vector<24x128xf32>,
    return
  }
  func.func @transform_0(%arg0: i32) -> (i32, i32) {
    %c0_i32 = arith.constant 0 : i32
    %c0_i32_0 = arith.constant 0 : i32
    return %arg0, %c0_i32 : i32, i32
  }
  func.func @transform_1(%arg0: i32) -> (i32, i32) {
    %c0_i32 = arith.constant 0 : i32
    %c0_i32_0 = arith.constant 0 : i32
    %c0_i32_1 = arith.constant 0 : i32
    return %c0_i32, %c0_i32_0 : i32, i32
  }
  func.func @transform_2(%arg0: i32) -> (i32, i32) {
    %c0_i32 = arith.constant 0 : i32
    %c0_i32_0 = arith.constant 0 : i32
    %c0_i32_1 = arith.constant 0 : i32
    return %c0_i32, %c0_i32_0 : i32, i32
  }
  func.func @transform_3(%arg0: i32) -> (i32, i32) {
    %c0_i32 = arith.constant 0 : i32
    %c0_i32_0 = arith.constant 0 : i32
    return %arg0, %c0_i32 : i32, i32
  }
}

</mosaic_0001>

<llo_original>
// kernel: tpu_custom_call.1
$region0: #{tpu_custom_call.1}
  #allocation0 [shape = 'u32[]', space=smem, size = 0x4, offset = 0x4, fixed_abs, tag = 'smem constant byte address 0x4 - core index']
  #allocation1 [shape = 'u32[72,128]{1,0:T(1,128)}', space=vmem, size = 0x9000, scoped, tag = 'internal scratch']
  %s0 = inlined_call_operand.vmem [shape: f32[24,13], index: 0, kind: input, shape index: {}]
  %s1 = inlined_call_operand.vmem [shape: bf16[13,128], index: 1, kind: input, shape index: {}]
  %s2 = inlined_call_operand.vmem [shape: f32[1,128], index: 2, kind: input, shape index: {}]
  %s3 = inlined_call_operand.hbm [shape: f32[24,128], index: 3, kind: output, shape index: {}]
  %s4 = sld [smem:[#allocation0]]
  $region22: #{tpu_custom_call.1} parent=0
    _
  %s6 = ssub.s32 1, %s4
  %s7 = scalar_select 0, %s6, %s4
  $region1: #{tpu_custom_call.1} parent=0
    #allocation2 [shape = 'u8[12288]{0}', space=vmem, size = 0x3000, scoped, tag = 'output window, operand 0, single buffered']
    #allocation3 [shape = 's32[1]{0}', space=sflag, size = 0x4, scoped, tag = 'scoped memory for tpu_custom_call.1']
    %8 = vsyncpa [#allocation3], 0
    // Predicated region
    $region2: #{tpu_custom_call.1} parent=1 // pred_check
      _
    $region3: #{tpu_custom_call.1} parent=1 // pred_check_branch
      %10 = sbr.rel (0) target = $region5
    $region4: #{tpu_custom_call.1} parent=1 // pred_region
      _
    $region5: #{tpu_custom_call.1} parent=1 // pred_fallthru
      _
    // Predicated region
    $region6: #{tpu_custom_call.1} parent=1 // pred_check
      _
    $region7: #{tpu_custom_call.1} parent=1 // pred_check_branch
      %12 = sbr.rel (0) target = $region9
    $region8: #{tpu_custom_call.1} parent=1 // pred_region
      _
    $region9: #{tpu_custom_call.1} parent=1 // pred_fallthru
      _
    // Predicated region
    $region10: #{tpu_custom_call.1} parent=1 // pred_check
      _
    $region11: #{tpu_custom_call.1} parent=1 // pred_check_branch
      %14 = sbr.rel (0) target = $region13
    $region12: #{tpu_custom_call.1} parent=1 // pred_region
      _
    $region13: #{tpu_custom_call.1} parent=1 // pred_fallthru
      _
    %v16 = vld [vmem:[%s0] sm:$0xff]
    %v17 = vld [vmem:[%s0 + $0x8] sm:$0xff]
    %v18 = vld [vmem:[%s0 + $0x10] sm:$0xff]
    %v19 = vpack.c.bf16 %v17, %v16
    %v20 = vpack.c.bf16 %v18, %v18
    %v21 = vld [vmem:[%s1] sm:$0xf]
    %v22 = vld [vmem:[%s1 + $0x4] sm:$0x7]
    %v23 = vld [vmem:[%s2] sm:$0x1]
    %v25 = vperm.slane %v23, 0
    %v29 = vunpack.c.l.b16 %v21
    %v30 = vunpack.c.l.b16 %v22
    %v31 = vpack.c.b16 %v30, %v29
    %vm32 = vcmask 105472
    %v34 = vsel %vm32, %v19, 0
    %v37 = vsel %vm32, %v20, 0
    %vm39 = vcmask 1045504
    %vm40 = vcmask 1046528
    %v41 = vsel %vm39, 4294967295, 65535
    %v42 = vsel %vm40, %v41, 0
    %v44 = vand.u32 %v31, %v42
    %46 = vmatpush.bf16.msra.mxu0 0
    %47 = vmatpush.bf16.msra.mxu0 0
    %48 = vmatpush.bf16.msra.mxu0 0
    %49 = vmatpush.bf16.msra.mxu0 0
    %50 = vmatpush.bf16.msra.mxu0 0
    %51 = vmatpush.bf16.msra.mxu0 0
    %52 = vmatpush.bf16.msra.mxu0 0
    %53 = vmatpush.bf16.msra.mxu0 %v44
    %54 = vmatmul.bf16.gmra.mxu0 %v34
    %v55 = vpop.f32.mrf.mxu0
    %v56 = vadd.f32 %v25, %v55
    %v57 = vpop.f32.mrf.mxu0
    %v58 = vadd.f32 %v25, %v57
    %59 = vmatmul.bf16.gmra.mxu0 %v37
    %v60 = vpop.f32.mrf.mxu0
    %v61 = vadd.f32 %v25, %v60
    %v62 = vpop.f32.mrf.mxu0
    %63 = vdwg.mxu0
    %v64 = vmul.f32 %v56, 0.5
    %v65 = vmul.f32 %v58, 0.5
    %v66 = vmul.f32 %v61, 0.5
    %v67 = vmul.f32 %v56, 0.044715
    %v68 = vmul.f32 %v58, 0.044715
    %v69 = vmul.f32 %v61, 0.044715
    %v70 = vmul.f32 %v67, %v56
    %v71 = vmul.f32 %v68, %v58
    %v72 = vmul.f32 %v69, %v61
    %v73 = vmul.f32 %v70, %v56
    %v74 = vmul.f32 %v71, %v58
    %v75 = vmul.f32 %v72, %v61
    %v76 = vadd.f32 %v56, %v73
    %v77 = vadd.f32 %v58, %v74
    %v78 = vadd.f32 %v61, %v75
    %v79 = vmul.f32 %v76, 0.7978846
    %v80 = vmul.f32 %v77, 0.7978846
    %v81 = vmul.f32 %v78, 0.7978846
    %v82 = vtanh.pop %v79
    %v83 = vtanh.pop %v80
    %v84 = vtanh.pop %v81
    %v85 = vadd.f32 %v82, 1.0
    %v86 = vadd.f32 %v83, 1.0
    %v87 = vadd.f32 %v84, 1.0
    %v88 = vmul.f32 %v64, %v85
    %v89 = vmul.f32 %v65, %v86
    %v90 = vmul.f32 %v66, %v87
    %91 = vst [vmem:[#allocation2] sm:$0xff] %v88
    %92 = vst [vmem:[#allocation2 + $0x8] sm:$0xff] %v89
    %93 = vst [vmem:[#allocation2 + $0x10] sm:$0xff] %v90
    // Predicated region
    $region14: #{tpu_custom_call.1} parent=1 // pred_check
      _
    $region15: #{tpu_custom_call.1} parent=1 // pred_check_branch
      %95 = sbr.rel (0) target = $region17
    $region16: #{tpu_custom_call.1} parent=1 // pred_region
      %97 = vsyncadd [#allocation3], 0
      %s98 = sshll.u32 [#allocation2], 4
      %s99 = int_to_ptr.vmem [resolvable:$true] %s98
      %s100 = sshll.u32 %s3, 4
      %s101 = int_to_ptr.hbm [resolvable:$true] %s100
      %106 = dma.vmem_to_hbm [thread:$0]  %s99, 384, %s101, [#allocation3], 128, 128, 8
    $region17: #{tpu_custom_call.1} parent=1 // pred_fallthru
      _
    // Predicated region
    $region18: #{tpu_custom_call.1} parent=1 // pred_check
      _
    $region19: #{tpu_custom_call.1} parent=1 // pred_check_branch
      %108 = sbr.rel (0) target = $region21
    $region20: #{tpu_custom_call.1} parent=1 // pred_region
      %110 = dma.done [#allocation3], 384
    $region21: #{tpu_custom_call.1} parent=1 // pred_fallthru
      _
    %111 = vsyncpa [#allocation3], 1

</llo_original>
